<compile_context>
chip_gen: v6e
topology: v6e:2x2x1
jax: 0.10.0
libtpu: 0.0.40
codegen_flags: <defaults>
</compile_context>

<pallas_src>
import sys

import jax
import jax.numpy as jnp
from jax import lax
from jax.experimental import pallas as pl
from jax.experimental.pallas import tpu as pltpu


# -----------------------------------------------------------------------------
# Kernel 1: fused multi-parameter EMA update (in place).
#   For every parameter i:  shadow_i <- shadow_i - (1 - decay) * (shadow_i - model_i)
# -----------------------------------------------------------------------------
def _make_ema_update_kernel(n_params):
    def kernel(*refs):
        shadow_refs = refs[:n_params]
        param_refs = refs[n_params:2 * n_params]
        omd_ref = refs[2 * n_params]                 # (1 - decay) scalar in SMEM
        out_refs = refs[2 * n_params + 1:]
        omd = omd_ref[0]
        for s_ref, p_ref, o_ref in zip(shadow_refs, param_refs, out_refs):
            s = s_ref[...]
            o_ref[...] = (s - omd * (s - p_ref[...])).astype(o_ref.dtype)
    return kernel


def _full_spec(shape):
    ndim = len(shape)
    return pl.BlockSpec(tuple(shape), lambda: (0,) * ndim)


def _canon2d(shape):
    """Free (contiguous/bitcast) 2-D view of a parameter for the kernel refs."""
    shape = tuple(int(d) for d in shape)
    if len(shape) == 0:
        return (1, 1)
    if len(shape) == 1:
        return (1, shape[0])
    rows = 1
    for d in shape[:-1]:
        rows *= d
    return (rows, shape[-1])


def _ema_update(shadow_leaves, param_leaves, omd):
    """One pallas_call updating all shadow parameters in place (aliased outputs)."""
    n = len(shadow_leaves)
    orig_shapes = [x.shape for x in shadow_leaves]
    shapes2d = [_canon2d(s) for s in orig_shapes]
    s2 = [jnp.reshape(x, s) for x, s in zip(shadow_leaves, shapes2d)]
    p2 = [jnp.reshape(x, s) for x, s in zip(param_leaves, shapes2d)]

    # TODO(synk): if any single parameter outgrows VMEM (~10s of MiB), give it a
    # row-tiled grid instead of a full-array block.
    out = pl.pallas_call(
        _make_ema_update_kernel(n),
        out_shape=tuple(jax.ShapeDtypeStruct(s, x.dtype)
                        for s, x in zip(shapes2d, shadow_leaves)),
        in_specs=([_full_spec(s) for s in shapes2d]            # shadows
                  + [_full_spec(s) for s in shapes2d]          # model params
                  + [pl.BlockSpec(memory_space=pltpu.MemorySpace.SMEM)]),
        out_specs=tuple(_full_spec(s) for s in shapes2d),
        input_output_aliases={i: i for i in range(n)},         # in-place shadow update
    )(*s2, *p2, omd)
    return tuple(jnp.reshape(r, s) for r, s in zip(out, orig_shapes))


_ema_update_jit = jax.jit(_ema_update, donate_argnums=(0,))


# -----------------------------------------------------------------------------
# Kernel 2: inner model forward (Linear: y = x @ W.T + b), weight in PyTorch layout.
# -----------------------------------------------------------------------------
def _linear_kernel(x_ref, w_ref, b_ref, o_ref):
    # x: (N, D_in), w: (D_out, D_in) -> contract both on dim 1 (x @ W.T on the MXU).
    acc = lax.dot_general(x_ref[...], w_ref[...],
                          dimension_numbers=(((1,), (1,)), ((), ())),
                          preferred_element_type=jnp.float32)
    o_ref[...] = (acc + b_ref[...]).astype(o_ref.dtype)


def linear_forward(x, weight, bias):
    """x: (N, D_in); weight: (D_out, D_in) (PyTorch layout); bias: (D_out,).

    The wrapped Linear is tiny, so a single full-array block fits VMEM everywhere.
    # TODO(synk): tile (128, 128, 256) with an f32 VMEM accumulator if the Linear grows.
    """
    n, d_in = x.shape
    d_out = weight.shape[0]
    b2 = bias.reshape(1, d_out)
    return pl.pallas_call(
        _linear_kernel,
        out_shape=jax.ShapeDtypeStruct((n, d_out), x.dtype),
        in_specs=[pl.BlockSpec((n, d_in), lambda: (0, 0)),
                  pl.BlockSpec((d_out, d_in), lambda: (0, 0)),
                  pl.BlockSpec((1, d_out), lambda: (0, 0))],
        out_specs=pl.BlockSpec((n, d_out), lambda: (0, 0)),
    )(x, weight, b2)


# -----------------------------------------------------------------------------
# EMA wrapper (mirrors the PyTorch module's semantics)
# -----------------------------------------------------------------------------
class EMA:
    def __init__(self, model_params, decay, model_buffers=None):
        self.decay = float(decay)
        self.model = dict(model_params)                       # live parameters
        self.model_buffers = dict(model_buffers) if model_buffers else {}
        self.training = True

        self._names = list(self.model.keys())
        # Shadow = detached copy of the model (native per-parameter layout).
        self.shadow = {n: jnp.copy(self.model[n]) for n in self._names}
        self.shadow_buffers = {k: jnp.copy(v) for k, v in self.model_buffers.items()}

    def update(self):
        if not self.training:
            print("EMA update should only be called during training",
                  file=sys.stderr, flush=True)
            return
        assert set(self.model.keys()) == set(self.shadow.keys())
        omd = jnp.asarray([1.0 - self.decay], dtype=jnp.float32)
        shadow_leaves = tuple(self.shadow[n] for n in self._names)
        param_leaves = tuple(self.model[n] for n in self._names)
        new_shadow = _ema_update_jit(shadow_leaves, param_leaves, omd)
        self.shadow = dict(zip(self._names, new_shadow))
        # Buffers are copied verbatim (the wrapped Linear has none).
        assert set(self.model_buffers.keys()) == set(self.shadow_buffers.keys())
        self.shadow_buffers = {k: jnp.copy(v) for k, v in self.model_buffers.items()}

    def __call__(self, x):
        params = self.model if self.training else self.shadow
        return linear_forward(x, params["weight"], params["bias"])


if __name__ == "__main__":
    key = jax.random.PRNGKey(0)
    k_x, k_w, k_b, k_dw, k_db = jax.random.split(key, 5)

    N, D_IN, D_OUT = 8, 32, 32
    x = jax.random.normal(k_x, (N, D_IN), dtype=jnp.float32)
    weight = jax.random.normal(k_w, (D_OUT, D_IN), dtype=jnp.float32) * 0.1
    bias = jax.random.normal(k_b, (D_OUT,), dtype=jnp.float32) * 0.1

    ema = EMA({"weight": weight, "bias": bias}, decay=0.99)

    # Training-mode forward uses the live model parameters.
    ema.training = True
    y_train = jax.block_until_ready(ema(x))

    # Simulate an optimizer step on the live model, then two EMA updates
    # (the second exercises the donated / aliased in-place path again).
    new_weight = weight + 0.05 * jax.random.normal(k_dw, weight.shape, jnp.float32)
    new_bias = bias + 0.05 * jax.random.normal(k_db, bias.shape, jnp.float32)
    ema.model["weight"] = new_weight
    ema.model["bias"] = new_bias
    ema.update()
    jax.block_until_ready(ema.shadow["weight"])
    ema.update()
    jax.block_until_ready(ema.shadow["weight"])

    # Eval-mode forward uses the shadow (EMA) parameters.
    ema.training = False
    y_eval = jax.block_until_ready(ema(x))

    # Pure-JAX references.
    d = 1.0 - 0.99
    ref_shadow_w = weight - d * (weight - new_weight)
    ref_shadow_b = bias - d * (bias - new_bias)
    ref_shadow_w = ref_shadow_w - d * (ref_shadow_w - new_weight)   # second update
    ref_shadow_b = ref_shadow_b - d * (ref_shadow_b - new_bias)
    ref_train = x @ weight.T + bias
    ref_eval = x @ ref_shadow_w.T + ref_shadow_b

    assert jnp.allclose(y_train, ref_train, atol=1e-5), "training forward mismatch"
    assert jnp.allclose(ema.shadow["weight"], ref_shadow_w, atol=1e-6), "EMA weight mismatch"
    assert jnp.allclose(ema.shadow["bias"], ref_shadow_b, atol=1e-6), "EMA bias mismatch"
    assert jnp.allclose(y_eval, ref_eval, atol=1e-5), "eval forward mismatch"

    print("KERNEL_OK")
</pallas_src>

<mosaic_0001>
module attributes {stable_mosaic.version = 11 : i64} {
  func.func @_linear_kernel(%arg0: memref<8x32xf32, #tpu.memory_space<vmem>>, %arg1: memref<32x32xf32, #tpu.memory_space<vmem>>, %arg2: memref<1x32xf32, #tpu.memory_space<vmem>>, %arg3: memref<8x32xf32, #tpu.memory_space<vmem>>) attributes {dimension_semantics = [], scalar_prefetch = 0 : i64, scratch_operands = 0 : i64, tpu.core_type = #tpu.core_type<tc>} {
    %c0 = arith.constant 0 : index
    %c0_0 = arith.constant 0 : index
    %0 = vector.load %arg0[%c0, %c0_0] : memref<8x32xf32, #tpu.memory_space<vmem>>, vector<8x32xf32>
    %c0_1 = arith.constant 0 : index
    %c0_2 = arith.constant 0 : index
    %1 = vector.load %arg1[%c0_1, %c0_2] : memref<32x32xf32, #tpu.memory_space<vmem>>, vector<32x32xf32>
    %cst = arith.constant dense<0.000000e+00> : vector<8x32xf32>
    %2 = tpu.matmul %0, %1, %cst {dimension_numbers = #tpu.dot_dimension_numbers<[1], [1], [0], [0], [0, 0, 1, 0], [], []>} : vector<8x32xf32>, vector<32x32xf32>, vector<8x32xf32> -> vector<8x32xf32>
    %c0_3 = arith.constant 0 : index
    %c0_4 = arith.constant 0 : index
    %3 = vector.load %arg2[%c0_3, %c0_4] : memref<1x32xf32, #tpu.memory_space<vmem>>, vector<1x32xf32>
    %4 = vector.broadcast %3 : vector<1x32xf32> to vector<8x32xf32>
    %5 = arith.addf %2, %4 : vector<8x32xf32>
    %c0_5 = arith.constant 0 : index
    %c0_6 = arith.constant 0 : index
    %6 = vector.load %arg3[%c0_5, %c0_6] : memref<8x32xf32, #tpu.memory_space<vmem>>, vector<8x32xf32>
    tpu.vector_store %arg3[%c0_5, %c0_6], %5 {strides = array<i32>} : memref<8x32xf32, #tpu.memory_space<vmem>>, vector<8x32xf32>,
    return
  }
}

</mosaic_0001>

<llo_original>
// kernel: tpu_custom_call.1
$region0: #{tpu_custom_call.1}
  #allocation0 [shape = 'u32[]', space=smem, size = 0x4, offset = 0x4, fixed_abs, tag = 'smem constant byte address 0x4 - core index']
  #allocation1 [shape = 'u32[144,128]{1,0:T(1,128)}', space=vmem, size = 0x12000, scoped, tag = 'internal scratch']
  %s0 = inlined_call_operand.hbm [shape: f32[8,32], index: 0, kind: input, shape index: {}]
  %s1 = inlined_call_operand.hbm [shape: f32[32,32], index: 1, kind: input, shape index: {}]
  %s2 = inlined_call_operand.vmem [shape: f32[1,32], index: 2, kind: input, shape index: {}]
  %s3 = inlined_call_operand.hbm [shape: f32[8,32], index: 3, kind: output, shape index: {}]
  %s4 = sld [smem:[#allocation0]]
  $region30: #{tpu_custom_call.1} parent=0
    _
  %s6 = ssub.s32 1, %s4
  %s7 = scalar_select 0, %s6, %s4
  $region1: #{tpu_custom_call.1} parent=0
    #allocation2 [shape = 'u8[4096]{0}', space=vmem, size = 0x1000, scoped, tag = 'input window, operand 0, single buffered']
    #allocation3 [shape = 's32[1]{0}', space=sflag, size = 0x4, scoped, tag = 'scoped memory for tpu_custom_call.1']
    #allocation4 [shape = 's32[1]{0}', space=sflag, size = 0x4, scoped, tag = 'scoped memory for tpu_custom_call.1']
    #allocation5 [shape = 'u8[16384]{0}', space=vmem, size = 0x4000, scoped, tag = 'input window, operand 1, single buffered']
    #allocation6 [shape = 's32[1]{0}', space=sflag, size = 0x4, scoped, tag = 'scoped memory for tpu_custom_call.1']
    #allocation7 [shape = 'u8[4096]{0}', space=vmem, size = 0x1000, scoped, tag = 'output window, operand 0, single buffered']
    %8 = vsyncpa [#allocation3], 0
    %9 = vsyncpa [#allocation6], 0
    %10 = vsyncpa [#allocation4], 0
    // Predicated region
    $region2: #{tpu_custom_call.1} parent=1 // pred_check
      _
    $region3: #{tpu_custom_call.1} parent=1 // pred_check_branch
      %12 = sbr.rel (0) target = $region5
    $region4: #{tpu_custom_call.1} parent=1 // pred_region
      %s14 = ssub.s32 128, 128
      %15 = vsyncadd [#allocation3], %s14
      %s17 = sshll.u32 [#allocation2], 4
      %s18 = int_to_ptr.vmem [resolvable:$true] %s17
      %20 = dma.hbm_to_vmem [thread:$0]  %s0, 128, %s18, [#allocation3]
    $region5: #{tpu_custom_call.1} parent=1 // pred_fallthru
      _
    // Predicated region
    $region6: #{tpu_custom_call.1} parent=1 // pred_check
      _
    $region7: #{tpu_custom_call.1} parent=1 // pred_check_branch
      %22 = sbr.rel (0) target = $region9
    $region8: #{tpu_custom_call.1} parent=1 // pred_region
      %s24 = ssub.s32 512, 512
      %25 = vsyncadd [#allocation6], %s24
      %s26 = sshll.u32 [#allocation5], 4
      %s27 = int_to_ptr.vmem [resolvable:$true] %s26
      %32 = dma.hbm_to_vmem [thread:$0]  %s1, 512, %s27, [#allocation6], 128, 128, 8
    $region9: #{tpu_custom_call.1} parent=1 // pred_fallthru
      _
    // Predicated region
    $region10: #{tpu_custom_call.1} parent=1 // pred_check
      _
    $region11: #{tpu_custom_call.1} parent=1 // pred_check_branch
      %34 = sbr.rel (0) target = $region13
    $region12: #{tpu_custom_call.1} parent=1 // pred_region
      _
    $region13: #{tpu_custom_call.1} parent=1 // pred_fallthru
      _
    // Predicated region
    $region14: #{tpu_custom_call.1} parent=1 // pred_check
      _
    $region15: #{tpu_custom_call.1} parent=1 // pred_check_branch
      %36 = sbr.rel (0) target = $region17
    $region16: #{tpu_custom_call.1} parent=1 // pred_region
      %37 = dma.done [#allocation3], 128
    $region17: #{tpu_custom_call.1} parent=1 // pred_fallthru
      _
    // Predicated region
    $region18: #{tpu_custom_call.1} parent=1 // pred_check
      _
    $region19: #{tpu_custom_call.1} parent=1 // pred_check_branch
      %39 = sbr.rel (0) target = $region21
    $region20: #{tpu_custom_call.1} parent=1 // pred_region
      %40 = dma.done [#allocation6], 512
    $region21: #{tpu_custom_call.1} parent=1 // pred_fallthru
      _
    %v41 = vld [vmem:[#allocation2] sm:$0xff]
    %v42 = vld [vmem:[#allocation5] sm:$0xff]
    %v43 = vld [vmem:[#allocation5 + $0x8] sm:$0xff]
    %v44 = vld [vmem:[#allocation5 + $0x10] sm:$0xff]
    %v45 = vld [vmem:[#allocation5 + $0x18] sm:$0xff]
    %v46 = vld [vmem:[%s2] sm:$0x1]
    %v48 = vlaneseq
    %v49 = vshrl.u32 %v48, 7
    %v50 = vsub.s32 0, %v49
    %v51 = vrot.slane %v46, %v50
    %vm53 = vcmask 261120
    %v55 = vsel %vm53, %v41, 0
    %v58 = vsel %vm53, %v42, 0
    %v61 = vsel %vm53, %v43, 0
    %v64 = vsel %vm53, %v44, 0
    %v67 = vsel %vm53, %v45, 0
    %69 = vmatprep.subr.mxu0 0.0
    %70 = vmatpush1.xpose.msra.mxu0 0.0
    %71 = vmatprep.subr.mxu0 0.0
    %72 = vmatpush1.xpose.msra.mxu0 0.0
    %73 = vmatprep.subr.mxu0 0.0
    %74 = vmatpush1.xpose.msra.mxu0 0.0
    %75 = vmatprep.subr.mxu0 0.0
    %76 = vmatpush1.xpose.msra.mxu0 0.0
    %77 = vmatprep.subr.mxu0 0.0
    %78 = vmatpush1.xpose.msra.mxu0 0.0
    %79 = vmatprep.subr.mxu0 0.0
    %80 = vmatpush1.xpose.msra.mxu0 0.0
    %81 = vmatprep.subr.mxu0 0.0
    %82 = vmatpush1.xpose.msra.mxu0 0.0
    %83 = vmatprep.subr.mxu0 0.0
    %84 = vmatpush1.xpose.msra.mxu0 0.0
    %85 = vmatprep.subr.mxu0 0.0
    %86 = vmatpush1.xpose.msra.mxu0 0.0
    %87 = vmatprep.subr.mxu0 0.0
    %88 = vmatpush1.xpose.msra.mxu0 0.0
    %89 = vmatprep.subr.mxu0 0.0
    %90 = vmatpush1.xpose.msra.mxu0 0.0
    %91 = vmatprep.subr.mxu0 0.0
    %92 = vmatpush1.xpose.msra.mxu0 0.0
    %93 = vmatprep.subr.mxu0 0.0
    %94 = vmatpush1.xpose.msra.mxu0 %v67
    %95 = vmatprep.subr.mxu0 0.0
    %96 = vmatpush1.xpose.msra.mxu0 %v64
    %97 = vmatprep.subr.mxu0 0.0
    %98 = vmatpush1.xpose.msra.mxu0 %v61
    %99 = vmatprep.subr.mxu0 0.0
    %100 = vmatpush1.xpose.msra.mxu0 %v58
    %101 = vmatprep.subr.mxu0 0.0
    %102 = vmatpush2.xpose.msra.mxu0 0.0
    %103 = vmatprep.subr.mxu0 0.0
    %104 = vmatpush2.xpose.msra.mxu0 0.0
    %105 = vmatprep.subr.mxu0 0.0
    %106 = vmatpush2.xpose.msra.mxu0 0.0
    %107 = vmatprep.subr.mxu0 0.0
    %108 = vmatpush2.xpose.msra.mxu0 0.0
    %109 = vmatprep.subr.mxu0 0.0
    %110 = vmatpush2.xpose.msra.mxu0 0.0
    %111 = vmatprep.subr.mxu0 0.0
    %112 = vmatpush2.xpose.msra.mxu0 0.0
    %113 = vmatprep.subr.mxu0 0.0
    %114 = vmatpush2.xpose.msra.mxu0 0.0
    %115 = vmatprep.subr.mxu0 0.0
    %116 = vmatpush2.xpose.msra.mxu0 0.0
    %117 = vmatprep.subr.mxu0 0.0
    %118 = vmatpush2.xpose.msra.mxu0 0.0
    %119 = vmatprep.subr.mxu0 0.0
    %120 = vmatpush2.xpose.msra.mxu0 0.0
    %121 = vmatprep.subr.mxu0 0.0
    %122 = vmatpush2.xpose.msra.mxu0 0.0
    %123 = vmatprep.subr.mxu0 0.0
    %124 = vmatpush2.xpose.msra.mxu0 0.0
    %125 = vmatprep.subr.mxu0 0.0
    %126 = vmatpush2.xpose.msra.mxu0 0.0
    %127 = vmatprep.subr.mxu0 0.0
    %128 = vmatpush2.xpose.msra.mxu0 0.0
    %129 = vmatprep.subr.mxu0 0.0
    %130 = vmatpush2.xpose.msra.mxu0 0.0
    %131 = vmatprep.subr.mxu0 0.0
    %132 = vmatpush2.xpose.msra.mxu0 0.0
    %133 = vmatprep.mubr.f32.mxu0 0.0
    %134 = vmatmul.mubr.f32.gmra.mxu0 %v55
    %v135 = vpop.f32.mrf.mxu0
    %v136 = vadd.f32 %v51, %v135
    %v137 = vpop.f32.mrf.mxu0
    %138 = vdwg.mxu0
    %139 = vst.msk [vmem:[#allocation7] sm:$0xff] %vm53, %v136
    // Predicated region
    $region22: #{tpu_custom_call.1} parent=1 // pred_check
      _
    $region23: #{tpu_custom_call.1} parent=1 // pred_check_branch
      %141 = sbr.rel (0) target = $region25
    $region24: #{tpu_custom_call.1} parent=1 // pred_region
      %s143 = ssub.s32 128, 128
      %144 = vsyncadd [#allocation4], %s143
      %s146 = sshll.u32 [#allocation7], 4
      %s147 = int_to_ptr.vmem [resolvable:$true] %s146
      %149 = dma.vmem_to_hbm [thread:$0]  %s147, 128, %s3, [#allocation4]
    $region25: #{tpu_custom_call.1} parent=1 // pred_fallthru
      _
    // Predicated region
    $region26: #{tpu_custom_call.1} parent=1 // pred_check
      _
    $region27: #{tpu_custom_call.1} parent=1 // pred_check_branch
      %151 = sbr.rel (0) target = $region29
    $region28: #{tpu_custom_call.1} parent=1 // pred_region
      %152 = dma.done [#allocation4], 128
    $region29: #{tpu_custom_call.1} parent=1 // pred_fallthru
      _
    %153 = vsyncpa [#allocation3], 1
    %154 = vsyncpa [#allocation6], 1
    %155 = vsyncpa [#allocation4], 1

</llo_original>
